<compile_context>
chip_gen: v6e
topology: v6e:2x2x1
jax: 0.10.0
libtpu: 0.0.40
codegen_flags: <defaults>
</compile_context>

<pallas_src>
import functools

import jax
import jax.numpy as jnp
from jax.experimental import pallas as pl
from jax.experimental.pallas import tpu as pltpu

LN_EPS = 1e-5


def _round_up(x, m):
    return ((x + m - 1) // m) * m


def down_kernel(x_ref, w_ref, b_ref, o_ref, *, mxu_dtype):
    # x_ref: (tm, in_size) tile, w_ref: (in_size, out_size) fused LoRA weight,
    # b_ref: (1, out_size), o_ref: (tm, out_size)
    x = x_ref[...]
    if x.dtype != jnp.float32:
        x = x.astype(jnp.float32)

    # LayerNorm over last dim, no affine params. One-pass statistics.
    inv_n = jnp.float32(1.0 / x.shape[-1])
    mean = jnp.sum(x, axis=-1, keepdims=True) * inv_n
    mean_sq = jnp.sum(x * x, axis=-1, keepdims=True) * inv_n
    var = mean_sq - mean * mean
    xn = (x - mean) * jax.lax.rsqrt(var + LN_EPS)

    # Fused LoRA projection: single MXU matmul, f32 accumulate.
    w = w_ref[...]
    if mxu_dtype is not None and mxu_dtype != jnp.float32:
        xn = xn.astype(mxu_dtype)
        w = w.astype(mxu_dtype)
    elif w.dtype != jnp.float32:
        w = w.astype(jnp.float32)
    y = jnp.dot(xn, w, preferred_element_type=jnp.float32) + b_ref[...]

    # Dropout (eval mode) -> identity.
    o_ref[...] = y.astype(o_ref.dtype)


def down_forward(embeddings, w1, w2, b2, *, tm=1024, mxu_dtype=None):
    """embeddings: (batch, seq, in_size)
       w1: (in_size, k), w2: (k, out_size), b2: (out_size,)
       mxu_dtype: None/f32 (default, v5e-safe) or jnp.bfloat16 for v6e/v7x."""
    B, S, in_size = embeddings.shape
    out_size = w2.shape[1]
    M = B * S

    # Fuse the low-rank pair once on the wrapper side (free for inference).
    w = jnp.dot(w1, w2, preferred_element_type=jnp.float32)  # (in_size, out_size)
    b = b2.reshape(1, out_size).astype(jnp.float32)

    # Row tile: large (VMEM-cheap at in_size=32), but keep >=2 grid steps when
    # possible so both v7x TensorCores get work; multiple of 8 sublanes.
    tm_eff = max(8, min(tm, _round_up(pl.cdiv(M, 2), 8)))
    M_pad = _round_up(M, tm_eff)

    x2d = embeddings.reshape(M, in_size)
    if M_pad != M:
        x2d = jnp.pad(x2d, ((0, M_pad - M), (0, 0)))

    kernel = functools.partial(down_kernel, mxu_dtype=mxu_dtype)

    out2d = pl.pallas_call(
        kernel,
        out_shape=jax.ShapeDtypeStruct((M_pad, out_size), embeddings.dtype),
        grid_spec=pltpu.PrefetchScalarGridSpec(
            num_scalar_prefetch=0,
            grid=(M_pad // tm_eff,),
            in_specs=[
                pl.BlockSpec((tm_eff, in_size), lambda i: (i, 0)),
                # Constant index_map -> Pallas re-uses the resident block; no
                # per-step re-DMA of the tiny fused weight / bias.
                pl.BlockSpec((in_size, out_size), lambda i: (0, 0)),
                pl.BlockSpec((1, out_size), lambda i: (0, 0)),
            ],
            out_specs=pl.BlockSpec((tm_eff, out_size), lambda i: (i, 0)),
        ),
        compiler_params=pltpu.CompilerParams(
            dimension_semantics=("parallel",)),
    )(x2d, w, b)

    if M_pad != M:
        out2d = out2d[:M]
    return out2d.reshape(B, S, out_size)


def reference_forward(embeddings, w1, w2, b2):
    x = embeddings.astype(jnp.float32)
    mean = jnp.mean(x, axis=-1, keepdims=True)
    var = jnp.mean((x - mean) ** 2, axis=-1, keepdims=True)
    xn = (x - mean) * jax.lax.rsqrt(var + LN_EPS)
    h = xn @ w1
    y = h @ w2 + b2
    return y


if __name__ == "__main__":
    # Small shapes consistent with the module's forward:
    # Down(in_size=32, out_size=16) with LoRA rank k=8, batch=2, seq=8.
    batch, seq = 2, 8
    in_size, out_size, k = 32, 16, 8

    key = jax.random.PRNGKey(0)
    k_x, k_w1, k_w2, k_b2 = jax.random.split(key, 4)

    embeddings = jax.random.normal(k_x, (batch, seq, in_size), dtype=jnp.float32)

    # Deterministic parameter init (uniform, roughly torch Linear-style bounds).
    bound1 = 1.0 / (in_size ** 0.5)
    bound2 = 1.0 / (k ** 0.5)
    w1 = jax.random.uniform(k_w1, (in_size, k), jnp.float32, -bound1, bound1)
    w2 = jax.random.uniform(k_w2, (k, out_size), jnp.float32, -bound2, bound2)
    b2 = jax.random.uniform(k_b2, (out_size,), jnp.float32, -bound2, bound2)

    out = down_forward(embeddings, w1, w2, b2)
    out = jax.block_until_ready(out)

    ref = reference_forward(embeddings, w1, w2, b2)
    assert out.shape == (batch, seq, out_size)
    assert jnp.allclose(out, ref, atol=1e-4, rtol=1e-4)

    print("KERNEL_OK")
</pallas_src>

<mosaic_0001>
module attributes {stable_mosaic.version = 11 : i64} {
  func.func @down_kernel(%arg0: i32, %arg1: memref<8x32xf32, #tpu.memory_space<vmem>>, %arg2: memref<32x16xf32, #tpu.memory_space<vmem>>, %arg3: memref<1x16xf32, #tpu.memory_space<vmem>>, %arg4: memref<8x16xf32, #tpu.memory_space<vmem>>) attributes {dimension_semantics = [#tpu.dimension_semantics<parallel>], iteration_bounds = array<i64: 2>, scalar_prefetch = 0 : i64, scratch_operands = 0 : i64, tpu.core_type = #tpu.core_type<tc>, window_params = [{transform_indices = @transform_0, window_bounds = array<i64: 8, 32>}, {pipeline_mode = #tpu.pipeline_mode<synchronous>, transform_indices = @transform_1, window_bounds = array<i64: 32, 16>}, {pipeline_mode = #tpu.pipeline_mode<synchronous>, transform_indices = @transform_2, window_bounds = array<i64: 1, 16>}, {transform_indices = @transform_3, window_bounds = array<i64: 8, 16>}]} {
    %c0 = arith.constant 0 : index
    %c0_0 = arith.constant 0 : index
    %0 = vector.load %arg1[%c0, %c0_0] : memref<8x32xf32, #tpu.memory_space<vmem>>, vector<8x32xf32>
    %cst = arith.constant dense<0.000000e+00> : vector<8xf32>
    %1 = vector.multi_reduction <add>, %0, %cst [1] : vector<8x32xf32> to vector<8xf32>
    %2 = vector.shape_cast %1 : vector<8xf32> to vector<8x1xf32>
    %cst_1 = arith.constant 3.125000e-02 : f32
    %3 = vector.broadcast %cst_1 : f32 to vector<8x1xf32>
    %4 = arith.mulf %2, %3 : vector<8x1xf32>
    %5 = arith.mulf %0, %0 : vector<8x32xf32>
    %cst_2 = arith.constant dense<0.000000e+00> : vector<8xf32>
    %6 = vector.multi_reduction <add>, %5, %cst_2 [1] : vector<8x32xf32> to vector<8xf32>
    %7 = vector.shape_cast %6 : vector<8xf32> to vector<8x1xf32>
    %cst_3 = arith.constant 3.125000e-02 : f32
    %8 = vector.broadcast %cst_3 : f32 to vector<8x1xf32>
    %9 = arith.mulf %7, %8 : vector<8x1xf32>
    %10 = arith.mulf %4, %4 : vector<8x1xf32>
    %11 = arith.subf %9, %10 : vector<8x1xf32>
    %12 = vector.broadcast %4 : vector<8x1xf32> to vector<8x32xf32>
    %13 = arith.subf %0, %12 : vector<8x32xf32>
    %cst_4 = arith.constant 9.99999974E-6 : f32
    %14 = vector.broadcast %cst_4 : f32 to vector<8x1xf32>
    %15 = arith.addf %11, %14 : vector<8x1xf32>
    %16 = math.rsqrt %15 : vector<8x1xf32>
    %17 = vector.broadcast %16 : vector<8x1xf32> to vector<8x32xf32>
    %18 = arith.mulf %13, %17 : vector<8x32xf32>
    %c0_5 = arith.constant 0 : index
    %c0_6 = arith.constant 0 : index
    %19 = vector.load %arg2[%c0_5, %c0_6] : memref<32x16xf32, #tpu.memory_space<vmem>>, vector<32x16xf32>
    %cst_7 = arith.constant dense<0.000000e+00> : vector<8x16xf32>
    %20 = tpu.matmul %18, %19, %cst_7 {dimension_numbers = #tpu.dot_dimension_numbers<[1], [0], [0], [1], [0, 0, 1, 1], [], []>} : vector<8x32xf32>, vector<32x16xf32>, vector<8x16xf32> -> vector<8x16xf32>
    %c0_8 = arith.constant 0 : index
    %c0_9 = arith.constant 0 : index
    %21 = vector.load %arg3[%c0_8, %c0_9] : memref<1x16xf32, #tpu.memory_space<vmem>>, vector<1x16xf32>
    %22 = vector.broadcast %21 : vector<1x16xf32> to vector<8x16xf32>
    %23 = arith.addf %20, %22 : vector<8x16xf32>
    %c0_10 = arith.constant 0 : index
    %c0_11 = arith.constant 0 : index
    %24 = vector.load %arg4[%c0_10, %c0_11] : memref<8x16xf32, #tpu.memory_space<vmem>>, vector<8x16xf32>
    tpu.vector_store %arg4[%c0_10, %c0_11], %23 {strides = array<i32>} : memref<8x16xf32, #tpu.memory_space<vmem>>, vector<8x16xf32>,
    return
  }
  func.func @transform_0(%arg0: i32) -> (i32, i32) {
    %c0_i32 = arith.constant 0 : i32
    %c0_i32_0 = arith.constant 0 : i32
    return %arg0, %c0_i32 : i32, i32
  }
  func.func @transform_1(%arg0: i32) -> (i32, i32) {
    %c0_i32 = arith.constant 0 : i32
    %c0_i32_0 = arith.constant 0 : i32
    %c0_i32_1 = arith.constant 0 : i32
    return %c0_i32, %c0_i32_0 : i32, i32
  }
  func.func @transform_2(%arg0: i32) -> (i32, i32) {
    %c0_i32 = arith.constant 0 : i32
    %c0_i32_0 = arith.constant 0 : i32
    %c0_i32_1 = arith.constant 0 : i32
    return %c0_i32, %c0_i32_0 : i32, i32
  }
  func.func @transform_3(%arg0: i32) -> (i32, i32) {
    %c0_i32 = arith.constant 0 : i32
    %c0_i32_0 = arith.constant 0 : i32
    return %arg0, %c0_i32 : i32, i32
  }
}

</mosaic_0001>

<llo_original>
// kernel: tpu_custom_call.1
$region0: #{tpu_custom_call.1}
  #allocation0 [shape = 'u32[]', space=smem, size = 0x4, offset = 0x4, fixed_abs, tag = 'smem constant byte address 0x4 - core index']
  #allocation1 [shape = 'u32[144,128]{1,0:T(1,128)}', space=vmem, size = 0x12000, scoped, tag = 'internal scratch']
  %s0 = inlined_call_operand.vmem [shape: f32[16,32], index: 0, kind: input, shape index: {}]
  %s1 = inlined_call_operand.vmem [shape: f32[32,16], index: 1, kind: input, shape index: {}]
  %s2 = inlined_call_operand.vmem [shape: f32[1,16], index: 2, kind: input, shape index: {}]
  %s3 = inlined_call_operand.hbm [shape: f32[16,16], index: 3, kind: output, shape index: {}]
  %s4 = sld [smem:[#allocation0]]
  $region45: #{tpu_custom_call.1} parent=0
    _
  %s6 = ssub.s32 1, %s4
  %s7 = scalar_select 0, %s6, %s4
  $region1: #{tpu_custom_call.1} parent=0
    #allocation2 [shape = 'u8[8192]{0}', space=vmem, size = 0x2000, scoped, tag = 'output window, operand 0']
    #allocation3 [shape = 's32[2]{0}', space=sflag, size = 0x8, scoped, tag = 'scoped memory for tpu_custom_call.1']
    %8 = vsyncpa [#allocation3], 0
    %s9 = scalar_lea.sflag [#allocation3], 1
    %10 = vsyncpa %s9, 0
    loop: start=0, step=1, limit=4
    $region2: #{tpu_custom_call.1} parent=1 // loop_pre_header
      _
    $region3: #{tpu_custom_call.1} parent=1 // loop_header
      %s12 = sphi 0, %s16
      %p13 = scmp.ge.s32.totalorder %s12, 4
      %s22 = sphi 0, %s24
      %s25 = sphi 0, %s22
      %s26 = sphi 0, %s25
      %s42 = sphi 0, %s26
      %s46 = sphi 0, %s46
      %s48 = sphi 0, %s46
      %s49 = sphi 0, %s48
      %s63 = sphi 0, %s49
      %s67 = sphi 0, %s67
      %s69 = sphi 0, %s67
      %s70 = sphi 0, %s69
      %s84 = sphi 0, %s70
      %s90 = sphi 0, %s92
      %s93 = sphi 0, %s90
      %s94 = sphi 0, %s93
      %s110 = sphi 0, %s94
    $region4: #{tpu_custom_call.1} parent=1 // loop_header_branch
      %15 = sbr.rel (%p13) target = $region8
    $region5: #{tpu_custom_call.1} parent=1 // loop_body
      %s17 = ssub.s32 %s12, 1
      %s18 = ssub.s32 %s12, 2
      %s19 = sadd.s32 %s12, 1
      %s20 = ssub.s32 %s12, %s19
      %p21 = scmp.eq.s32.totalorder %s20, 0
      %s23 = sadd.s32 %s22, 1
      %s24 = scalar_select %p21, %s22, %s23
      %p27 = pneg %p21
      %p28 = scmp.eq.s32.totalorder %s12, 1
      %p29 = por %p27, %p28
      %p30 = scmp.ne.s32.totalorder %s22, %s25
      %p31 = scmp.eq.s32.totalorder %s12, 0
      %p32 = por %p30, %p31
      %p33 = scmp.ne.s32.totalorder %s22, %s25
      %p34 = scmp.eq.s32.totalorder %s17, 1
      %p35 = por %p33, %p34
      %p36 = scmp.ne.s32.totalorder %s25, %s26
      %p37 = scmp.eq.s32.totalorder %s17, 0
      %p38 = por %p36, %p37
      %p39 = scmp.ne.s32.totalorder %s25, %s26
      %p40 = scmp.eq.s32.totalorder %s18, 1
      %p41 = por %p39, %p40
      %p43 = scmp.ne.s32.totalorder %s26, %s42
      %p44 = scmp.eq.s32.totalorder %s18, 0
      %p45 = por %p43, %p44
      %s47 = sadd.s32 %s46, 1
      %p50 = scmp.eq.s32.totalorder %s12, 1
      %p51 = scmp.ne.s32.totalorder %s46, %s48
      %p52 = scmp.eq.s32.totalorder %s12, 0
      %p53 = por %p51, %p52
      %p54 = scmp.ne.s32.totalorder %s46, %s48
      %p55 = scmp.eq.s32.totalorder %s17, 1
      %p56 = por %p54, %p55
      %p57 = scmp.ne.s32.totalorder %s48, %s49
      %p58 = scmp.eq.s32.totalorder %s17, 0
      %p59 = por %p57, %p58
      %p60 = scmp.ne.s32.totalorder %s48, %s49
      %p61 = scmp.eq.s32.totalorder %s18, 1
      %p62 = por %p60, %p61
      %p64 = scmp.ne.s32.totalorder %s49, %s63
      %p65 = scmp.eq.s32.totalorder %s18, 0
      %p66 = por %p64, %p65
      %s68 = sadd.s32 %s67, 1
      %p71 = scmp.eq.s32.totalorder %s12, 1
      %p72 = scmp.ne.s32.totalorder %s67, %s69
      %p73 = scmp.eq.s32.totalorder %s12, 0
      %p74 = por %p72, %p73
      %p75 = scmp.ne.s32.totalorder %s67, %s69
      %p76 = scmp.eq.s32.totalorder %s17, 1
      %p77 = por %p75, %p76
      %p78 = scmp.ne.s32.totalorder %s69, %s70
      %p79 = scmp.eq.s32.totalorder %s17, 0
      %p80 = por %p78, %p79
      %p81 = scmp.ne.s32.totalorder %s69, %s70
      %p82 = scmp.eq.s32.totalorder %s18, 1
      %p83 = por %p81, %p82
      %p85 = scmp.ne.s32.totalorder %s70, %s84
      %p86 = scmp.eq.s32.totalorder %s18, 0
      %p87 = por %p85, %p86
      %s88 = ssub.s32 %s12, %s19
      %p89 = scmp.eq.s32.totalorder %s88, 0
      %s91 = sadd.s32 %s90, 1
      %s92 = scalar_select %p89, %s90, %s91
      %p95 = pneg %p89
      %p96 = scmp.eq.s32.totalorder %s12, 1
      %p97 = por %p95, %p96
      %p98 = scmp.ne.s32.totalorder %s90, %s93
      %p99 = scmp.eq.s32.totalorder %s12, 0
      %p100 = por %p98, %p99
      %p101 = scmp.ne.s32.totalorder %s90, %s93
      %p102 = scmp.eq.s32.totalorder %s17, 1
      %p103 = por %p101, %p102
      %p104 = scmp.ne.s32.totalorder %s93, %s94
      %p105 = scmp.eq.s32.totalorder %s17, 0
      %p106 = por %p104, %p105
      %p107 = scmp.ne.s32.totalorder %s93, %s94
      %p108 = scmp.eq.s32.totalorder %s18, 1
      %p109 = por %p107, %p108
      %p111 = scmp.ne.s32.totalorder %s94, %s110
      %p112 = scmp.eq.s32.totalorder %s18, 0
      %p113 = por %p111, %p112
      %p114 = scmp.le.s32.totalorder 1, %s12
      %p115 = scmp.lt.s32.totalorder %s12, 3
      %p116 = pnand %p114, %p115
      %p117 = pneg %p116
      // Predicated region
      $region9: #{tpu_custom_call.1} parent=5 // pred_check
        _
      $region10: #{tpu_custom_call.1} parent=5 // pred_check_branch
        %119 = sbr.rel (%p116) target = $region12
      $region11: #{tpu_custom_call.1} parent=5 // pred_region
        %s120 = ssub.s32 %s12, 1
        // Predicated region
        $region13: #{tpu_custom_call.1} parent=11 // pred_check
          %p121 = pneg %p59
        $region14: #{tpu_custom_call.1} parent=11 // pred_check_branch
          %123 = sbr.rel (%p121) target = $region16
        $region15: #{tpu_custom_call.1} parent=11 // pred_region
          _
        $region16: #{tpu_custom_call.1} parent=11 // pred_fallthru
          _
        // Predicated region
        $region17: #{tpu_custom_call.1} parent=11 // pred_check
          %p124 = pneg %p80
        $region18: #{tpu_custom_call.1} parent=11 // pred_check_branch
          %126 = sbr.rel (%p124) target = $region20
        $region19: #{tpu_custom_call.1} parent=11 // pred_region
          _
        $region20: #{tpu_custom_call.1} parent=11 // pred_fallthru
          _
      $region12: #{tpu_custom_call.1} parent=5 // pred_fallthru
        _
      %p127 = scmp.lt.s32.totalorder %s12, 2
      // Predicated region
      $region21: #{tpu_custom_call.1} parent=5 // pred_check
        %p128 = pneg %p127
      $region22: #{tpu_custom_call.1} parent=5 // pred_check_branch
        %130 = sbr.rel (%p128) target = $region24
      $region23: #{tpu_custom_call.1} parent=5 // pred_region
        // Predicated region
        $region25: #{tpu_custom_call.1} parent=23 // pred_check
          %p131 = pneg %p32
        $region26: #{tpu_custom_call.1} parent=23 // pred_check_branch
          %133 = sbr.rel (%p131) target = $region28
        $region27: #{tpu_custom_call.1} parent=23 // pred_region
          %p134 = scmp.lt.s32.totalorder %s12, 1
          %s135 = scalar_select %p134, %s12, 1
          %s136 = smul.addr %s135, 8
          %s137 = scalar_lea.vmem %s0, %s136
        $region28: #{tpu_custom_call.1} parent=23 // pred_fallthru
          _
      $region24: #{tpu_custom_call.1} parent=5 // pred_fallthru
        _
      %p138 = scmp.le.s32.totalorder 1, %s12
      %p139 = scmp.lt.s32.totalorder %s12, 3
      %p140 = pnand %p138, %p139
      %p141 = pneg %p140
      // Predicated region
      $region29: #{tpu_custom_call.1} parent=5 // pred_check
        _
      $region30: #{tpu_custom_call.1} parent=5 // pred_check_branch
        %143 = sbr.rel (%p140) target = $region32
      $region31: #{tpu_custom_call.1} parent=5 // pred_region
        %s144 = ssub.s32 %s12, 1
        %p145 = scmp.lt.s32.totalorder %s17, 1
        %s146 = scalar_select %p145, %s17, 1
        %s147 = smul.addr %s146, 8
        %s148 = scalar_lea.vmem %s0, %s147
        %p149 = pneg %p38
        %p150 = pneg %p35
        %p151 = pneg %p59
        %p152 = pneg %p56
        %p153 = pneg %p80
        %p154 = pneg %p77
        %p155 = pneg %p106
        %p156 = pneg %p103
        %s157 = sand.u32 %s93, 1
        %s158 = scalar_lea.sflag [#allocation3], %s157
        %s159 = sand.u32 %s93, 1
        %s160 = smul.addr %s159, 8
        %s161 = scalar_lea.vmem [#allocation2], %s160
        %p162 = scmp.lt.s32.totalorder %s17, 1
        %s163 = scalar_select %p162, %s17, 1
        %s164 = smul.addr %s163, 8
        %s165 = scalar_lea.vmem %s0, %s164
        %v166 = vld [vmem:[%s165] sm:$0xff]
        %vm167 = vcmask 261120
        %v168 = vsel %vm167, %v166, 0.0
        %169 = vadd.xlane.f32.xlu0 %v168
        %v170 = vpop.xlane.xlu0 %169
        %v171 = vmul.f32 %v170, 0.03125
        %v172 = vmul.f32 %v166, %v166
        %v173 = vsel %vm167, %v172, 0.0
        %174 = vadd.xlane.f32.xlu0 %v173
        %v175 = vpop.xlane.xlu0 %174
        %v176 = vmul.f32 %v175, 0.03125
        %v177 = vmul.f32 %v171, %v171
        %v178 = vsub.f32 %v176, %v177
        %v179 = vsub.f32 %v166, %v171
        %v180 = vadd.f32 %v178, 1e-05
        %v181 = vrsqrt.pop %v180
        %v182 = vmul.f32 %v179, %v181
        %v183 = vld [vmem:[%s1] sm:$0xff]
        %v184 = vld [vmem:[%s1 + $0x8] sm:$0xff]
        %v185 = vld [vmem:[%s1 + $0x10] sm:$0xff]
        %v186 = vld [vmem:[%s1 + $0x18] sm:$0xff]
        %v187 = vld [vmem:[%s2] sm:$0x1]
        %v189 = vlaneseq
        %v190 = vshrl.u32 %v189, 7
        %v191 = vsub.s32 0, %v190
        %v192 = vrot.slane %v187, %v191
        %v195 = vsel %vm167, %v182, 0
        %197 = vmatprep.subr.mxu0 0.0
        %198 = vmatpush1.msra.mxu0 0.0
        %199 = vmatprep.subr.mxu0 0.0
        %200 = vmatpush1.msra.mxu0 0.0
        %201 = vmatprep.subr.mxu0 0.0
        %202 = vmatpush1.msra.mxu0 0.0
        %203 = vmatprep.subr.mxu0 0.0
        %204 = vmatpush1.msra.mxu0 0.0
        %205 = vmatprep.subr.mxu0 0.0
        %206 = vmatpush1.msra.mxu0 0.0
        %207 = vmatprep.subr.mxu0 0.0
        %208 = vmatpush1.msra.mxu0 0.0
        %209 = vmatprep.subr.mxu0 0.0
        %210 = vmatpush1.msra.mxu0 0.0
        %211 = vmatprep.subr.mxu0 0.0
        %212 = vmatpush1.msra.mxu0 0.0
        %213 = vmatprep.subr.mxu0 0.0
        %214 = vmatpush1.msra.mxu0 0.0
        %215 = vmatprep.subr.mxu0 0.0
        %216 = vmatpush1.msra.mxu0 0.0
        %217 = vmatprep.subr.mxu0 0.0
        %218 = vmatpush1.msra.mxu0 0.0
        %219 = vmatprep.subr.mxu0 0.0
        %220 = vmatpush1.msra.mxu0 0.0
        %221 = vmatprep.subr.mxu0 0.0
        %222 = vmatpush1.msra.mxu0 %v186
        %223 = vmatprep.subr.mxu0 0.0
        %224 = vmatpush1.msra.mxu0 %v185
        %225 = vmatprep.subr.mxu0 0.0
        %226 = vmatpush1.msra.mxu0 %v184
        %227 = vmatprep.subr.mxu0 0.0
        %228 = vmatpush1.msra.mxu0 %v183
        %229 = vmatprep.subr.mxu0 0.0
        %230 = vmatpush2.msra.mxu0 0.0
        %231 = vmatprep.subr.mxu0 0.0
        %232 = vmatpush2.msra.mxu0 0.0
        %233 = vmatprep.subr.mxu0 0.0
        %234 = vmatpush2.msra.mxu0 0.0
        %235 = vmatprep.subr.mxu0 0.0
        %236 = vmatpush2.msra.mxu0 0.0
        %237 = vmatprep.subr.mxu0 0.0
        %238 = vmatpush2.msra.mxu0 0.0
        %239 = vmatprep.subr.mxu0 0.0
        %240 = vmatpush2.msra.mxu0 0.0
        %241 = vmatprep.subr.mxu0 0.0
        %242 = vmatpush2.msra.mxu0 0.0
        %243 = vmatprep.subr.mxu0 0.0
        %244 = vmatpush2.msra.mxu0 0.0
        %245 = vmatprep.subr.mxu0 0.0
        %246 = vmatpush2.msra.mxu0 0.0
        %247 = vmatprep.subr.mxu0 0.0
        %248 = vmatpush2.msra.mxu0 0.0
        %249 = vmatprep.subr.mxu0 0.0
        %250 = vmatpush2.msra.mxu0 0.0
        %251 = vmatprep.subr.mxu0 0.0
        %252 = vmatpush2.msra.mxu0 0.0
        %253 = vmatprep.subr.mxu0 0.0
        %254 = vmatpush2.msra.mxu0 0.0
        %255 = vmatprep.subr.mxu0 0.0
        %256 = vmatpush2.msra.mxu0 0.0
        %257 = vmatprep.subr.mxu0 0.0
        %258 = vmatpush2.msra.mxu0 0.0
        %259 = vmatprep.subr.mxu0 0.0
        %260 = vmatpush2.msra.mxu0 0.0
        %261 = vmatprep.mubr.f32.mxu0 0.0
        %262 = vmatmul.mubr.f32.gmra.mxu0 %v195
        %v263 = vpop.f32.mrf.mxu0
        %v264 = vadd.f32 %v192, %v263
        %v265 = vpop.f32.mrf.mxu0
        %266 = vdwg.mxu0
        %vm267 = vcmask 130048
        %268 = vst.msk [vmem:[%s161] sm:$0xff] %vm267, %v264
        %s269 = sand.u32 %s93, 1
        %s270 = scalar_lea.sflag [#allocation3], %s269
        %s271 = sand.u32 %s93, 1
        %s272 = smul.addr %s271, 8
        %s273 = scalar_lea.vmem [#allocation2], %s272
        // Predicated region
        $region33: #{tpu_custom_call.1} parent=31 // pred_check
          %p274 = pneg %p103
        $region34: #{tpu_custom_call.1} parent=31 // pred_check_branch
          %276 = sbr.rel (%p274) target = $region36
        $region35: #{tpu_custom_call.1} parent=31 // pred_region
          %s278 = ssub.s32 128, 128
          %279 = vsyncadd %s270, %s278
          %s280 = smul.addr %s17, 128
          %s281 = scalar_lea.hbm %s3, %s280
          %s283 = sshll.u32 %s273, 4
          %s284 = int_to_ptr.vmem [resolvable:$true] %s283
          %286 = dma.vmem_to_hbm [thread:$0]  %s284, 128, %s281, %s270
        $region36: #{tpu_custom_call.1} parent=31 // pred_fallthru
          _
      $region32: #{tpu_custom_call.1} parent=5 // pred_fallthru
        _
      %p287 = scmp.le.s32.totalorder 2, %s12
      // Predicated region
      $region37: #{tpu_custom_call.1} parent=5 // pred_check
        %p288 = pneg %p287
      $region38: #{tpu_custom_call.1} parent=5 // pred_check_branch
        %290 = sbr.rel (%p288) target = $region40
      $region39: #{tpu_custom_call.1} parent=5 // pred_region
        %s291 = ssub.s32 %s12, 2
        // Predicated region
        $region41: #{tpu_custom_call.1} parent=39 // pred_check
          %p292 = pneg %p109
        $region42: #{tpu_custom_call.1} parent=39 // pred_check_branch
          %294 = sbr.rel (%p292) target = $region44
        $region43: #{tpu_custom_call.1} parent=39 // pred_region
          %s295 = sand.u32 %s94, 1
          %s296 = scalar_lea.sflag [#allocation3], %s295
          %s297 = sand.u32 %s94, 1
          %s298 = smul.addr %s297, 8
          %s299 = scalar_lea.vmem [#allocation2], %s298
          %300 = dma.done %s296, 128
        $region44: #{tpu_custom_call.1} parent=39 // pred_fallthru
          _
      $region40: #{tpu_custom_call.1} parent=5 // pred_fallthru
        _
    $region6: #{tpu_custom_call.1} parent=1 // loop_footer
      %s16 = sadd.s32 1, %s12
    $region7: #{tpu_custom_call.1} parent=1 // loop_footer_branch
      %11 = sbr.rel target = $region3
    $region8: #{tpu_custom_call.1} parent=1 // loop_exit
      _
    %301 = vsyncpa [#allocation3], 1
    %s302 = scalar_lea.sflag [#allocation3], 1
    %303 = vsyncpa %s302, 1

</llo_original>
